<compile_context>
chip_gen: v5e
topology: v5e:2x2
jax: 0.10.0
libtpu: 0.0.40
codegen_flags: <defaults>
</compile_context>

<pallas_src>
import jax
import jax.numpy as jnp
from jax.experimental import pallas as pl
from jax.experimental.pallas import tpu as pltpu

_LANE = 128
_MAX_TILE = 1024  # rows; ~3 MiB of double-buffered f32 x+out tiles at most


def _round_up(a, b):
    return ((a + b - 1) // b) * b


def _pad2d(a, shape, value=0.0):
    return jnp.pad(a, [(0, t - s) for s, t in zip(a.shape, shape)],
                   constant_values=value)


def _choose_tb(batch):
    """Batch tile: large enough to amortize per-step overhead, but with
    >= 2 grid steps whenever the batch allows (v7x megacore sharding)."""
    if batch <= 16:
        return _round_up(batch, 8)
    return min(_MAX_TILE, _round_up(pl.cdiv(batch, 2), 8))


def netling_kernel(x_ref, w1_ref, b1_ref, w2_ref, b2_ref, w3_ref, b3_ref,
                   o_ref):
    # Cast x to bf16 in-kernel (VPU op, hidden under DMA) so the wrapper
    # doesn't need a padded bf16 copy of x in HBM.
    x = x_ref[...].astype(w1_ref.dtype)
    # fc1 + ReLU : bf16 operands on the MXU, f32 accumulate + f32 epilogue.
    h1 = jnp.dot(x, w1_ref[...],
                 preferred_element_type=jnp.float32) + b1_ref[...]
    h1 = jnp.maximum(h1, 0.0)
    # fc2 + ReLU (cast only the matmul operand back to bf16).
    h2 = jnp.dot(h1.astype(w2_ref.dtype), w2_ref[...],
                 preferred_element_type=jnp.float32) + b2_ref[...]
    h2 = jnp.maximum(h2, 0.0)
    # fc3 (output dim is UNPADDED: n_out lanes).
    logits = jnp.dot(h2.astype(w3_ref.dtype), w3_ref[...],
                     preferred_element_type=jnp.float32) + b3_ref[...]
    # Numerically stable softmax over the feature (last) axis, all in f32.
    # Exact division so every row sums to 1.0 to f32 precision.
    m = jnp.max(logits, axis=-1, keepdims=True)
    e = jnp.exp(logits - m)
    denom = jnp.sum(e, axis=-1, keepdims=True)
    o_ref[...] = (e / denom).astype(o_ref.dtype)


def prepare_params(w1, b1, w2, b2, w3, b3, mxu_dtype=jnp.bfloat16):
    """One-time parameter prep: zero-pad hidden dims to 128 lanes and cast
    matmul operands to bf16.  Keep this OFF the per-call forward path."""
    n_in, n_hidden = w1.shape
    n_out = w3.shape[1]
    n_h_p = _round_up(n_hidden, _LANE)

    # Zero padding of the hidden dim is exact: padded h1/h2 lanes are
    # ReLU(0 + 0) == 0 and padded w2/w3 rows are 0, so they contribute nothing.
    w1_p = _pad2d(w1, (n_in, n_h_p)).astype(mxu_dtype)
    w2_p = _pad2d(w2, (n_h_p, n_h_p)).astype(mxu_dtype)
    w3_p = _pad2d(w3, (n_h_p, n_out)).astype(mxu_dtype)
    b1_p = _pad2d(b1.astype(jnp.float32), (1, n_h_p))
    b2_p = _pad2d(b2.astype(jnp.float32), (1, n_h_p))
    b3_p = b3.astype(jnp.float32)  # output dim stays unpadded
    return (w1_p, b1_p, w2_p, b2_p, w3_p, b3_p)


def netling_forward(x, params):
    """x: (B, nIn) f32; params from prepare_params(). Returns (B, nOut)."""
    w1_p, b1_p, w2_p, b2_p, w3_p, b3_p = params
    batch, n_in = x.shape
    n_h_p = w1_p.shape[1]
    n_out = w3_p.shape[1]

    tb = _choose_tb(batch)
    batch_p = _round_up(batch, tb)
    # Row padding only when the batch isn't a tile multiple (no feature pad).
    x_in = x if batch_p == batch else jnp.pad(x, ((0, batch_p - batch), (0, 0)))

    grid = (batch_p // tb,)

    cost = pl.CostEstimate(
        flops=2 * batch_p * (n_in * n_h_p + n_h_p * n_h_p + n_h_p * n_out),
        transcendentals=batch_p * n_out,
        bytes_accessed=(x_in.size * 4
                        + (w1_p.size + w2_p.size + w3_p.size) * 2
                        + (b1_p.size + b2_p.size + b3_p.size) * 4
                        + batch_p * n_out * 4),
    )

    out = pl.pallas_call(
        netling_kernel,
        out_shape=jax.ShapeDtypeStruct((batch_p, n_out), jnp.float32),
        grid_spec=pltpu.PrefetchScalarGridSpec(
            num_scalar_prefetch=0,
            grid=grid,
            in_specs=[
                # x: one f32 batch tile per grid step (double-buffered).
                pl.BlockSpec((tb, n_in), lambda i: (i, 0)),
                # weights & biases: constant block index -> stay resident in
                # VMEM, no re-DMA across grid iterations.
                pl.BlockSpec((n_in, n_h_p), lambda i: (0, 0)),
                pl.BlockSpec((1, n_h_p), lambda i: (0, 0)),
                pl.BlockSpec((n_h_p, n_h_p), lambda i: (0, 0)),
                pl.BlockSpec((1, n_h_p), lambda i: (0, 0)),
                pl.BlockSpec((n_h_p, n_out), lambda i: (0, 0)),
                pl.BlockSpec((1, n_out), lambda i: (0, 0)),
            ],
            out_specs=pl.BlockSpec((tb, n_out), lambda i: (i, 0)),
        ),
        compiler_params=pltpu.CompilerParams(
            dimension_semantics=("parallel",)),
        cost_estimate=cost,
    )(x_in, w1_p, b1_p, w2_p, b2_p, w3_p, b3_p)

    return out if batch_p == batch else out[:batch]


def reference_matched(x, w1, b1, w2, b2, w3, b3):
    """Reference following the same bf16-matmul / f32-accumulate recipe."""
    bf = jnp.bfloat16
    h1 = jnp.maximum(
        jnp.dot(x.astype(bf), w1.astype(bf),
                preferred_element_type=jnp.float32) + b1, 0.0)
    h2 = jnp.maximum(
        jnp.dot(h1.astype(bf), w2.astype(bf),
                preferred_element_type=jnp.float32) + b2, 0.0)
    logits = jnp.dot(h2.astype(bf), w3.astype(bf),
                     preferred_element_type=jnp.float32) + b3
    return jax.nn.softmax(logits, axis=1)


def reference_f32(x, w1, b1, w2, b2, w3, b3):
    """Pure-f32 reference matching the PyTorch module semantics."""
    h1 = jnp.maximum(x @ w1 + b1, 0.0)
    h2 = jnp.maximum(h1 @ w2 + b2, 0.0)
    return jax.nn.softmax(h2 @ w3 + b3, axis=1)


if __name__ == "__main__":
    # Small shapes consistent with the module: nInput=32, nHidden=64, nOutput=16
    batch, n_input, n_hidden, n_output = 8, 32, 64, 16

    key = jax.random.PRNGKey(0)
    kx, k1, k2, k3, kb1, kb2, kb3, kx2 = jax.random.split(key, 8)

    x = jax.random.normal(kx, (batch, n_input), dtype=jnp.float32)

    # Deterministic parameter init (PyTorch-style uniform fan-in magnitude).
    def init_w(k, fan_in, fan_out):
        bound = 1.0 / jnp.sqrt(fan_in)
        return jax.random.uniform(k, (fan_in, fan_out), jnp.float32,
                                  -bound, bound)

    def init_b(k, fan_in, fan_out):
        bound = 1.0 / jnp.sqrt(fan_in)
        return jax.random.uniform(k, (1, fan_out), jnp.float32, -bound, bound)

    w1 = init_w(k1, n_input, n_hidden)
    b1 = init_b(kb1, n_input, n_hidden)
    w2 = init_w(k2, n_hidden, n_hidden)
    b2 = init_b(kb2, n_hidden, n_hidden)
    w3 = init_w(k3, n_hidden, n_output)
    b3 = init_b(kb3, n_hidden, n_output)

    # One-time parameter prep (padding/casts hoisted off the forward path).
    params = prepare_params(w1, b1, w2, b2, w3, b3)

    out = netling_forward(x, params)
    out = jax.block_until_ready(out)

    ref_m = reference_matched(x, w1, b1, w2, b2, w3, b3)
    ref_f = reference_f32(x, w1, b1, w2, b2, w3, b3)

    assert out.shape == (batch, n_output)
    # Tight check vs. the same bf16-matmul recipe.
    assert jnp.allclose(out, ref_m, atol=1e-4, rtol=1e-4), \
        "mismatch vs matched (bf16-matmul) JAX reference"
    # Semantic check vs. the full-f32 PyTorch-equivalent forward (slack for
    # bf16 weight/activation rounding feeding the MXU).
    assert jnp.allclose(out, ref_f, atol=5e-3, rtol=5e-3), \
        "mismatch vs f32 JAX reference"
    # Softmax rows sum to 1 (exact division in the epilogue).
    assert jnp.allclose(jnp.sum(out, axis=1), 1.0, atol=1e-5)

    # Second call with a batch that is not a tile multiple: exercises the
    # >=2-step grid path and row padding.
    batch2 = 40
    x2 = jax.random.normal(kx2, (batch2, n_input), dtype=jnp.float32)
    out2 = jax.block_until_ready(netling_forward(x2, params))
    ref2 = reference_f32(x2, w1, b1, w2, b2, w3, b3)
    assert out2.shape == (batch2, n_output)
    assert jnp.allclose(out2, ref2, atol=5e-3, rtol=5e-3), \
        "mismatch vs f32 JAX reference (batch=40)"
    assert jnp.allclose(jnp.sum(out2, axis=1), 1.0, atol=1e-5)

    print("KERNEL_OK")
</pallas_src>

<mosaic_0001>
module attributes {stable_mosaic.version = 11 : i64} {
  func.func @netling_kernel(%arg0: i32, %arg1: memref<8x32xf32, #tpu.memory_space<vmem>>, %arg2: memref<32x128xbf16, #tpu.memory_space<vmem>>, %arg3: memref<1x128xf32, #tpu.memory_space<vmem>>, %arg4: memref<128x128xbf16, #tpu.memory_space<vmem>>, %arg5: memref<1x128xf32, #tpu.memory_space<vmem>>, %arg6: memref<128x16xbf16, #tpu.memory_space<vmem>>, %arg7: memref<1x16xf32, #tpu.memory_space<vmem>>, %arg8: memref<8x16xf32, #tpu.memory_space<vmem>>) attributes {dimension_semantics = [#tpu.dimension_semantics<parallel>], iteration_bounds = array<i64: 1>, scalar_prefetch = 0 : i64, scratch_operands = 0 : i64, tpu.core_type = #tpu.core_type<tc>, window_params = [{transform_indices = @transform_0, window_bounds = array<i64: 8, 32>}, {pipeline_mode = #tpu.pipeline_mode<synchronous>, transform_indices = @transform_1, window_bounds = array<i64: 32, 128>}, {pipeline_mode = #tpu.pipeline_mode<synchronous>, transform_indices = @transform_2, window_bounds = array<i64: 1, 128>}, {pipeline_mode = #tpu.pipeline_mode<synchronous>, transform_indices = @transform_3, window_bounds = array<i64: 128, 128>}, {pipeline_mode = #tpu.pipeline_mode<synchronous>, transform_indices = @transform_4, window_bounds = array<i64: 1, 128>}, {pipeline_mode = #tpu.pipeline_mode<synchronous>, transform_indices = @transform_5, window_bounds = array<i64: 128, 16>}, {pipeline_mode = #tpu.pipeline_mode<synchronous>, transform_indices = @transform_6, window_bounds = array<i64: 1, 16>}, {transform_indices = @transform_7, window_bounds = array<i64: 8, 16>}]} {
    %c0 = arith.constant 0 : index
    %c0_0 = arith.constant 0 : index
    %0 = vector.load %arg1[%c0, %c0_0] : memref<8x32xf32, #tpu.memory_space<vmem>>, vector<8x32xf32>
    %1 = arith.truncf %0 : vector<8x32xf32> to vector<8x32xbf16>
    %c0_1 = arith.constant 0 : index
    %c0_2 = arith.constant 0 : index
    %2 = vector.load %arg2[%c0_1, %c0_2] : memref<32x128xbf16, #tpu.memory_space<vmem>>, vector<32x128xbf16>
    %cst = arith.constant dense<0.000000e+00> : vector<8x128xf32>
    %3 = tpu.matmul %1, %2, %cst {dimension_numbers = #tpu.dot_dimension_numbers<[1], [0], [0], [1], [0, 0, 1, 1], [], []>} : vector<8x32xbf16>, vector<32x128xbf16>, vector<8x128xf32> -> vector<8x128xf32>
    %c0_3 = arith.constant 0 : index
    %c0_4 = arith.constant 0 : index
    %4 = vector.load %arg3[%c0_3, %c0_4] : memref<1x128xf32, #tpu.memory_space<vmem>>, vector<1x128xf32>
    %5 = vector.broadcast %4 : vector<1x128xf32> to vector<8x128xf32>
    %6 = arith.addf %3, %5 : vector<8x128xf32>
    %cst_5 = arith.constant 0.000000e+00 : f32
    %7 = vector.broadcast %cst_5 : f32 to vector<8x128xf32>
    %8 = arith.maximumf %6, %7 : vector<8x128xf32>
    %9 = arith.truncf %8 : vector<8x128xf32> to vector<8x128xbf16>
    %c0_6 = arith.constant 0 : index
    %c0_7 = arith.constant 0 : index
    %10 = vector.load %arg4[%c0_6, %c0_7] : memref<128x128xbf16, #tpu.memory_space<vmem>>, vector<128x128xbf16>
    %cst_8 = arith.constant dense<0.000000e+00> : vector<8x128xf32>
    %11 = tpu.matmul %9, %10, %cst_8 {dimension_numbers = #tpu.dot_dimension_numbers<[1], [0], [0], [1], [0, 0, 1, 1], [], []>} : vector<8x128xbf16>, vector<128x128xbf16>, vector<8x128xf32> -> vector<8x128xf32>
    %c0_9 = arith.constant 0 : index
    %c0_10 = arith.constant 0 : index
    %12 = vector.load %arg5[%c0_9, %c0_10] : memref<1x128xf32, #tpu.memory_space<vmem>>, vector<1x128xf32>
    %13 = vector.broadcast %12 : vector<1x128xf32> to vector<8x128xf32>
    %14 = arith.addf %11, %13 : vector<8x128xf32>
    %cst_11 = arith.constant 0.000000e+00 : f32
    %15 = vector.broadcast %cst_11 : f32 to vector<8x128xf32>
    %16 = arith.maximumf %14, %15 : vector<8x128xf32>
    %17 = arith.truncf %16 : vector<8x128xf32> to vector<8x128xbf16>
    %c0_12 = arith.constant 0 : index
    %c0_13 = arith.constant 0 : index
    %18 = vector.load %arg6[%c0_12, %c0_13] : memref<128x16xbf16, #tpu.memory_space<vmem>>, vector<128x16xbf16>
    %cst_14 = arith.constant dense<0.000000e+00> : vector<8x16xf32>
    %19 = tpu.matmul %17, %18, %cst_14 {dimension_numbers = #tpu.dot_dimension_numbers<[1], [0], [0], [1], [0, 0, 1, 1], [], []>} : vector<8x128xbf16>, vector<128x16xbf16>, vector<8x16xf32> -> vector<8x16xf32>
    %c0_15 = arith.constant 0 : index
    %c0_16 = arith.constant 0 : index
    %20 = vector.load %arg7[%c0_15, %c0_16] : memref<1x16xf32, #tpu.memory_space<vmem>>, vector<1x16xf32>
    %21 = vector.broadcast %20 : vector<1x16xf32> to vector<8x16xf32>
    %22 = arith.addf %19, %21 : vector<8x16xf32>
    %cst_17 = arith.constant dense<0xFF800000> : vector<8xf32>
    %23 = vector.multi_reduction <maximumf>, %22, %cst_17 [1] : vector<8x16xf32> to vector<8xf32>
    %24 = vector.shape_cast %23 : vector<8xf32> to vector<8x1xf32>
    %25 = vector.broadcast %24 : vector<8x1xf32> to vector<8x16xf32>
    %26 = arith.subf %22, %25 : vector<8x16xf32>
    %27 = math.exp %26 : vector<8x16xf32>
    %cst_18 = arith.constant dense<0.000000e+00> : vector<8xf32>
    %28 = vector.multi_reduction <add>, %27, %cst_18 [1] : vector<8x16xf32> to vector<8xf32>
    %29 = vector.shape_cast %28 : vector<8xf32> to vector<8x1xf32>
    %30 = vector.broadcast %29 : vector<8x1xf32> to vector<8x16xf32>
    %31 = arith.divf %27, %30 : vector<8x16xf32>
    %c0_19 = arith.constant 0 : index
    %c0_20 = arith.constant 0 : index
    %32 = vector.load %arg8[%c0_19, %c0_20] : memref<8x16xf32, #tpu.memory_space<vmem>>, vector<8x16xf32>
    tpu.vector_store %arg8[%c0_19, %c0_20], %31 {strides = array<i32>} : memref<8x16xf32, #tpu.memory_space<vmem>>, vector<8x16xf32>,
    return
  }
  func.func @transform_0(%arg0: i32) -> (i32, i32) {
    %c0_i32 = arith.constant 0 : i32
    %c0_i32_0 = arith.constant 0 : i32
    return %arg0, %c0_i32 : i32, i32
  }
  func.func @transform_1(%arg0: i32) -> (i32, i32) {
    %c0_i32 = arith.constant 0 : i32
    %c0_i32_0 = arith.constant 0 : i32
    %c0_i32_1 = arith.constant 0 : i32
    return %c0_i32, %c0_i32_0 : i32, i32
  }
  func.func @transform_2(%arg0: i32) -> (i32, i32) {
    %c0_i32 = arith.constant 0 : i32
    %c0_i32_0 = arith.constant 0 : i32
    %c0_i32_1 = arith.constant 0 : i32
    return %c0_i32, %c0_i32_0 : i32, i32
  }
  func.func @transform_3(%arg0: i32) -> (i32, i32) {
    %c0_i32 = arith.constant 0 : i32
    %c0_i32_0 = arith.constant 0 : i32
    %c0_i32_1 = arith.constant 0 : i32
    return %c0_i32, %c0_i32_0 : i32, i32
  }
  func.func @transform_4(%arg0: i32) -> (i32, i32) {
    %c0_i32 = arith.constant 0 : i32
    %c0_i32_0 = arith.constant 0 : i32
    %c0_i32_1 = arith.constant 0 : i32
    return %c0_i32, %c0_i32_0 : i32, i32
  }
  func.func @transform_5(%arg0: i32) -> (i32, i32) {
    %c0_i32 = arith.constant 0 : i32
    %c0_i32_0 = arith.constant 0 : i32
    %c0_i32_1 = arith.constant 0 : i32
    return %c0_i32, %c0_i32_0 : i32, i32
  }
  func.func @transform_6(%arg0: i32) -> (i32, i32) {
    %c0_i32 = arith.constant 0 : i32
    %c0_i32_0 = arith.constant 0 : i32
    %c0_i32_1 = arith.constant 0 : i32
    return %c0_i32, %c0_i32_0 : i32, i32
  }
  func.func @transform_7(%arg0: i32) -> (i32, i32) {
    %c0_i32 = arith.constant 0 : i32
    %c0_i32_0 = arith.constant 0 : i32
    return %arg0, %c0_i32 : i32, i32
  }
}

</mosaic_0001>

<llo_original>
// kernel: tpu_custom_call.1
$region0: #{tpu_custom_call.1}
  #allocation0 [shape = 'u32[]', space=smem, size = 0x4, offset = 0x4, fixed_abs, tag = 'smem constant byte address 0x4 - core index']
  #allocation1 [shape = 'u32[72,128]{1,0:T(1,128)}', space=vmem, size = 0x9000, scoped, tag = 'internal scratch']
  %s0 = inlined_call_operand.vmem [shape: f32[8,32], index: 0, kind: input, shape index: {}]
  %s1 = inlined_call_operand.hbm [shape: bf16[32,128], index: 1, kind: input, shape index: {}]
  %s2 = inlined_call_operand.vmem [shape: f32[1,128], index: 2, kind: input, shape index: {}]
  %s3 = inlined_call_operand.vmem [shape: bf16[128,128], index: 3, kind: input, shape index: {}]
  %s4 = inlined_call_operand.vmem [shape: f32[1,128], index: 4, kind: input, shape index: {}]
  %s5 = inlined_call_operand.vmem [shape: bf16[128,16], index: 5, kind: input, shape index: {}]
  %s6 = inlined_call_operand.vmem [shape: f32[1,16], index: 6, kind: input, shape index: {}]
  %s7 = inlined_call_operand.hbm [shape: f32[8,16], index: 7, kind: output, shape index: {}]
  %s8 = sld [smem:[#allocation0]]
  $region42: #{tpu_custom_call.1} parent=0
    _
  %s10 = ssub.s32 1, %s8
  %s11 = scalar_select 0, %s10, %s8
  $region1: #{tpu_custom_call.1} parent=0
    #allocation2 [shape = 'u8[8192]{0}', space=vmem, size = 0x2000, scoped, tag = 'input window, operand 1, single buffered']
    #allocation3 [shape = 's32[1]{0}', space=sflag, size = 0x4, scoped, tag = 'scoped memory for tpu_custom_call.1']
    #allocation4 [shape = 's32[1]{0}', space=sflag, size = 0x4, scoped, tag = 'scoped memory for tpu_custom_call.1']
    #allocation5 [shape = 'u8[4096]{0}', space=vmem, size = 0x1000, scoped, tag = 'output window, operand 0, single buffered']
    %12 = vsyncpa [#allocation3], 0
    %13 = vsyncpa [#allocation4], 0
    // Predicated region
    $region2: #{tpu_custom_call.1} parent=1 // pred_check
      _
    $region3: #{tpu_custom_call.1} parent=1 // pred_check_branch
      %15 = sbr.rel (0) target = $region5
    $region4: #{tpu_custom_call.1} parent=1 // pred_region
      _
    $region5: #{tpu_custom_call.1} parent=1 // pred_fallthru
      _
    // Predicated region
    $region6: #{tpu_custom_call.1} parent=1 // pred_check
      _
    $region7: #{tpu_custom_call.1} parent=1 // pred_check_branch
      %17 = sbr.rel (0) target = $region9
    $region8: #{tpu_custom_call.1} parent=1 // pred_region
      %19 = vsyncadd [#allocation3], 0
      %s20 = sshll.u32 %s1, 4
      %s21 = int_to_ptr.hbm [resolvable:$true] %s20
      %s22 = sshll.u32 [#allocation2], 4
      %s23 = int_to_ptr.vmem [resolvable:$true] %s22
      %28 = dma.hbm_to_vmem [thread:$0]  %s21, 256, %s23, [#allocation3], 64, 64, 4
    $region9: #{tpu_custom_call.1} parent=1 // pred_fallthru
      _
    // Predicated region
    $region10: #{tpu_custom_call.1} parent=1 // pred_check
      _
    $region11: #{tpu_custom_call.1} parent=1 // pred_check_branch
      %30 = sbr.rel (0) target = $region13
    $region12: #{tpu_custom_call.1} parent=1 // pred_region
      _
    $region13: #{tpu_custom_call.1} parent=1 // pred_fallthru
      _
    // Predicated region
    $region14: #{tpu_custom_call.1} parent=1 // pred_check
      _
    $region15: #{tpu_custom_call.1} parent=1 // pred_check_branch
      %32 = sbr.rel (0) target = $region17
    $region16: #{tpu_custom_call.1} parent=1 // pred_region
      _
    $region17: #{tpu_custom_call.1} parent=1 // pred_fallthru
      _
    // Predicated region
    $region18: #{tpu_custom_call.1} parent=1 // pred_check
      _
    $region19: #{tpu_custom_call.1} parent=1 // pred_check_branch
      %34 = sbr.rel (0) target = $region21
    $region20: #{tpu_custom_call.1} parent=1 // pred_region
      _
    $region21: #{tpu_custom_call.1} parent=1 // pred_fallthru
      _
    // Predicated region
    $region22: #{tpu_custom_call.1} parent=1 // pred_check
      _
    $region23: #{tpu_custom_call.1} parent=1 // pred_check_branch
      %36 = sbr.rel (0) target = $region25
    $region24: #{tpu_custom_call.1} parent=1 // pred_region
      _
    $region25: #{tpu_custom_call.1} parent=1 // pred_fallthru
      _
    // Predicated region
    $region26: #{tpu_custom_call.1} parent=1 // pred_check
      _
    $region27: #{tpu_custom_call.1} parent=1 // pred_check_branch
      %38 = sbr.rel (0) target = $region29
    $region28: #{tpu_custom_call.1} parent=1 // pred_region
      _
    $region29: #{tpu_custom_call.1} parent=1 // pred_fallthru
      _
    // Predicated region
    $region30: #{tpu_custom_call.1} parent=1 // pred_check
      _
    $region31: #{tpu_custom_call.1} parent=1 // pred_check_branch
      %40 = sbr.rel (0) target = $region33
    $region32: #{tpu_custom_call.1} parent=1 // pred_region
      %42 = dma.done [#allocation3], 256
    $region33: #{tpu_custom_call.1} parent=1 // pred_fallthru
      _
    %v44 = vld [vmem:[%s0] sm:$0xff]
    %v45 = vpack.c.bf16 %v44, %v44
    %v46 = vld [vmem:[#allocation2] sm:$0xf]
    %v47 = vld [vmem:[#allocation2 + $0x4] sm:$0xf]
    %v48 = vld [vmem:[#allocation2 + $0x8] sm:$0xf]
    %v49 = vld [vmem:[#allocation2 + $0xc] sm:$0xf]
    %v50 = vld [vmem:[%s2] sm:$0x1]
    %v52 = vperm.slane %v50, 0
    %v58 = vunpack.c.l.b16 %v46
    %v59 = vunpack.c.l.b16 %v47
    %v60 = vunpack.c.l.b16 %v48
    %v61 = vunpack.c.l.b16 %v49
    %v62 = vpack.c.b16 %v59, %v58
    %v63 = vpack.c.b16 %v61, %v60
    %vm66 = vcmask 261120
    %v68 = vsel %vm66, %v45, 0
    %70 = vmatpush.bf16.msra.mxu0 0
    %71 = vmatpush.bf16.msra.mxu0 0
    %72 = vmatpush.bf16.msra.mxu0 0
    %73 = vmatpush.bf16.msra.mxu0 0
    %74 = vmatpush.bf16.msra.mxu0 0
    %75 = vmatpush.bf16.msra.mxu0 0
    %76 = vmatpush.bf16.msra.mxu0 %v63
    %77 = vmatpush.bf16.msra.mxu0 %v62
    %78 = vmatmul.bf16.gmra.mxu0 %v68
    %v79 = vpop.f32.mrf.mxu0
    %v80 = vadd.f32 %v52, %v79
    %v81 = vpop.f32.mrf.mxu0
    %82 = vdwg.mxu0
    %v83 = vmax.f32 %v80, 0.0
    %v84 = vpack.c.bf16 %v83, %v83
    %v85 = vld [vmem:[%s3] sm:$0xf]
    %v86 = vld [vmem:[%s3 + $0x4] sm:$0xf]
    %v87 = vld [vmem:[%s3 + $0x8] sm:$0xf]
    %v88 = vld [vmem:[%s3 + $0xc] sm:$0xf]
    %v89 = vld [vmem:[%s3 + $0x10] sm:$0xf]
    %v90 = vld [vmem:[%s3 + $0x14] sm:$0xf]
    %v91 = vld [vmem:[%s3 + $0x18] sm:$0xf]
    %v92 = vld [vmem:[%s3 + $0x1c] sm:$0xf]
    %v93 = vld [vmem:[%s3 + $0x20] sm:$0xf]
    %v94 = vld [vmem:[%s3 + $0x24] sm:$0xf]
    %v95 = vld [vmem:[%s3 + $0x28] sm:$0xf]
    %v96 = vld [vmem:[%s3 + $0x2c] sm:$0xf]
    %v97 = vld [vmem:[%s3 + $0x30] sm:$0xf]
    %v98 = vld [vmem:[%s3 + $0x34] sm:$0xf]
    %v99 = vld [vmem:[%s3 + $0x38] sm:$0xf]
    %v100 = vld [vmem:[%s3 + $0x3c] sm:$0xf]
    %v101 = vld [vmem:[%s4] sm:$0x1]
    %v103 = vperm.slane %v101, 0
    %v121 = vunpack.c.l.b16 %v85
    %v122 = vunpack.c.l.b16 %v86
    %v123 = vunpack.c.l.b16 %v87
    %v124 = vunpack.c.l.b16 %v88
    %v125 = vunpack.c.l.b16 %v89
    %v126 = vunpack.c.l.b16 %v90
    %v127 = vunpack.c.l.b16 %v91
    %v128 = vunpack.c.l.b16 %v92
    %v129 = vunpack.c.l.b16 %v93
    %v130 = vunpack.c.l.b16 %v94
    %v131 = vunpack.c.l.b16 %v95
    %v132 = vunpack.c.l.b16 %v96
    %v133 = vunpack.c.l.b16 %v97
    %v134 = vunpack.c.l.b16 %v98
    %v135 = vunpack.c.l.b16 %v99
    %v136 = vunpack.c.l.b16 %v100
    %v137 = vpack.c.b16 %v122, %v121
    %v138 = vpack.c.b16 %v124, %v123
    %v139 = vpack.c.b16 %v126, %v125
    %v140 = vpack.c.b16 %v128, %v127
    %v141 = vpack.c.b16 %v130, %v129
    %v142 = vpack.c.b16 %v132, %v131
    %v143 = vpack.c.b16 %v134, %v133
    %v144 = vpack.c.b16 %v136, %v135
    %153 = vmatpush.bf16.msra.mxu0 %v144
    %154 = vmatpush.bf16.msra.mxu0 %v143
    %155 = vmatpush.bf16.msra.mxu0 %v142
    %156 = vmatpush.bf16.msra.mxu0 %v141
    %157 = vmatpush.bf16.msra.mxu0 %v140
    %158 = vmatpush.bf16.msra.mxu0 %v139
    %159 = vmatpush.bf16.msra.mxu0 %v138
    %160 = vmatpush.bf16.msra.mxu0 %v137
    %161 = vmatmul.bf16.gmra.mxu0 %v84
    %v162 = vpop.f32.mrf.mxu0
    %v163 = vadd.f32 %v103, %v162
    %v164 = vpop.f32.mrf.mxu0
    %165 = vdwg.mxu0
    %v166 = vmax.f32 %v163, 0.0
    %v167 = vpack.c.bf16 %v166, %v166
    %v168 = vld [vmem:[%s5] sm:$0xf]
    %v169 = vld [vmem:[%s5 + $0x4] sm:$0xf]
    %v170 = vld [vmem:[%s5 + $0x8] sm:$0xf]
    %v171 = vld [vmem:[%s5 + $0xc] sm:$0xf]
    %v172 = vld [vmem:[%s5 + $0x10] sm:$0xf]
    %v173 = vld [vmem:[%s5 + $0x14] sm:$0xf]
    %v174 = vld [vmem:[%s5 + $0x18] sm:$0xf]
    %v175 = vld [vmem:[%s5 + $0x1c] sm:$0xf]
    %v176 = vld [vmem:[%s5 + $0x20] sm:$0xf]
    %v177 = vld [vmem:[%s5 + $0x24] sm:$0xf]
    %v178 = vld [vmem:[%s5 + $0x28] sm:$0xf]
    %v179 = vld [vmem:[%s5 + $0x2c] sm:$0xf]
    %v180 = vld [vmem:[%s5 + $0x30] sm:$0xf]
    %v181 = vld [vmem:[%s5 + $0x34] sm:$0xf]
    %v182 = vld [vmem:[%s5 + $0x38] sm:$0xf]
    %v183 = vld [vmem:[%s5 + $0x3c] sm:$0xf]
    %v184 = vld [vmem:[%s6] sm:$0x1]
    %v186 = vperm.slane %v184, 0
    %v204 = vunpack.c.l.b16 %v168
    %v205 = vunpack.c.l.b16 %v169
    %v206 = vunpack.c.l.b16 %v170
    %v207 = vunpack.c.l.b16 %v171
    %v208 = vunpack.c.l.b16 %v172
    %v209 = vunpack.c.l.b16 %v173
    %v210 = vunpack.c.l.b16 %v174
    %v211 = vunpack.c.l.b16 %v175
    %v212 = vunpack.c.l.b16 %v176
    %v213 = vunpack.c.l.b16 %v177
    %v214 = vunpack.c.l.b16 %v178
    %v215 = vunpack.c.l.b16 %v179
    %v216 = vunpack.c.l.b16 %v180
    %v217 = vunpack.c.l.b16 %v181
    %v218 = vunpack.c.l.b16 %v182
    %v219 = vunpack.c.l.b16 %v183
    %v220 = vpack.c.b16 %v205, %v204
    %v221 = vpack.c.b16 %v207, %v206
    %v222 = vpack.c.b16 %v209, %v208
    %v223 = vpack.c.b16 %v211, %v210
    %v224 = vpack.c.b16 %v213, %v212
    %v225 = vpack.c.b16 %v215, %v214
    %v226 = vpack.c.b16 %v217, %v216
    %v227 = vpack.c.b16 %v219, %v218
    %236 = vmatpush.bf16.msra.mxu0 %v227
    %237 = vmatpush.bf16.msra.mxu0 %v226
    %238 = vmatpush.bf16.msra.mxu0 %v225
    %239 = vmatpush.bf16.msra.mxu0 %v224
    %240 = vmatpush.bf16.msra.mxu0 %v223
    %241 = vmatpush.bf16.msra.mxu0 %v222
    %242 = vmatpush.bf16.msra.mxu0 %v221
    %243 = vmatpush.bf16.msra.mxu0 %v220
    %244 = vmatmul.bf16.gmra.mxu0 %v167
    %v245 = vpop.f32.mrf.mxu0
    %v246 = vadd.f32 %v186, %v245
    %v247 = vpop.f32.mrf.mxu0
    %248 = vdwg.mxu0
    %vm249 = vcmask 130048
    %v250 = vsel %vm249, %v246, -inf
    %251 = vmax.xlane.f32.xlu0 %v250
    %v252 = vpop.xlane.xlu0 %251
    %v253 = vsub.f32 %v246, %v252
    %v254 = vmul.f32 %v253, 1.442695
    %v255 = vpow.pop %v254
    %v256 = vsel %vm249, %v255, 0.0
    %257 = vadd.xlane.f32.xlu0 %v256
    %v258 = vpop.xlane.xlu0 %257
    %v259 = vrcp.pop %v258
    %v260 = vmul.f32 %v258, %v259
    %v261 = vsub.f32 1.0, %v260
    %v262 = vmul.f32 %v259, %v261
    %v263 = vadd.f32 %v259, %v262
    %vm264 = vweird.f32 %v258
    %vm265 = vweird.f32 %v259
    %vm266 = vmor %vm264, %vm265
    %v267 = vsel %vm266, %v259, %v263
    %v268 = vand.u32 2147483647, %v258
    %vm269 = vcmp.eq.f32.partialorder %v268, 8.507059e+37
    %v270 = vand.u32 %v258, 2147483648
    %v271 = vor.u32 1.1754944e-38, %v270
    %v272 = vsel %vm269, %v271, %v267
    %v273 = vmul.f32 %v255, %v272
    %274 = vst.msk [vmem:[#allocation5] sm:$0xff] %vm249, %v273
    // Predicated region
    $region34: #{tpu_custom_call.1} parent=1 // pred_check
      _
    $region35: #{tpu_custom_call.1} parent=1 // pred_check_branch
      %276 = sbr.rel (0) target = $region37
    $region36: #{tpu_custom_call.1} parent=1 // pred_region
      %278 = vsyncadd [#allocation4], 0
      %s280 = sshll.u32 [#allocation5], 4
      %s281 = int_to_ptr.vmem [resolvable:$true] %s280
      %s282 = sshll.u32 %s7, 4
      %s283 = int_to_ptr.hbm [resolvable:$true] %s282
      %285 = dma.vmem_to_hbm [thread:$0]  %s281, 128, %s283, [#allocation4]
    $region37: #{tpu_custom_call.1} parent=1 // pred_fallthru
      _
    // Predicated region
    $region38: #{tpu_custom_call.1} parent=1 // pred_check
      _
    $region39: #{tpu_custom_call.1} parent=1 // pred_check_branch
      %287 = sbr.rel (0) target = $region41
    $region40: #{tpu_custom_call.1} parent=1 // pred_region
      %289 = dma.done [#allocation4], 128
    $region41: #{tpu_custom_call.1} parent=1 // pred_fallthru
      _
    %290 = vsyncpa [#allocation3], 1
    %291 = vsyncpa [#allocation4], 1

</llo_original>
